<compile_context>
chip_gen: v5e
topology: v5e:2x2
jax: 0.10.0
libtpu: 0.0.40
codegen_flags: <defaults>
</compile_context>

<pallas_src>
import functools

import jax
import jax.numpy as jnp
from jax.experimental import pallas as pl
from jax.experimental.pallas import tpu as pltpu

QMIN = -128.0  # torch.qint8
QMAX = 127.0


def _qdq_kernel(x_ref, p_ref, o_ref):
    """Fused per-row quantize->dequantize, zero point folded into clamp bounds."""
    x = x_ref[...]                      # [tile_r, tile_l] float32
    p = p_ref[...]                      # [tile_r, 4]: [inv_scale, scale, lo, hi]
    inv_s = p[:, 0:1]
    s = p[:, 1:2]
    lo = p[:, 2:3]
    hi = p[:, 3:4]
    # ATen: q = clamp(zp + nearbyint(x*inv_s), QMIN, QMAX); dq = (q - zp) * s
    # Folded (exact): dq = clamp(nearbyint(x*inv_s), QMIN - zp, QMAX - zp) * s
    r = jnp.round(x * inv_s)            # round-half-to-even == nearbyint
    o_ref[...] = jnp.clip(r, lo, hi) * s


def _round_up(x, m):
    return ((x + m - 1) // m) * m


@functools.partial(jax.jit, static_argnames=("axis",))
def quantize_dequantize_per_channel(x, scales, zero_points, axis=1):
    """x: [N, C, H, W] float32; scales/zero_points: [C]. axis must be 1 (NCHW channel)."""
    assert axis == 1, "kernel is specialized for channel axis = 1 (NCHW)"
    N, C, H, W = x.shape
    R, L = N * C, H * W

    x2d = x.reshape(R, L).astype(jnp.float32)      # contiguous reshape: free

    scales_f = scales.astype(jnp.float32).reshape(C)
    zps_f = zero_points.astype(jnp.float32).reshape(C)
    # Packed per-channel params: [inv_scale, scale, lo, hi]  (divides hoisted to host)
    params_c = jnp.stack(
        [1.0 / scales_f, scales_f, QMIN - zps_f, QMAX - zps_f], axis=-1)   # [C, 4]
    params = jnp.tile(params_c, (N, 1))            # [R, 4]; row r = n*C + c

    # --- static tiling (shapes are compile-time constants under jit) -------
    TARGET_TILE_BYTES = 2 * 1024 * 1024            # ~2 MiB f32 data tile
    MAX_ALIGNED_TILE_L = TARGET_TILE_BYTES // (8 * 4)   # 65536, multiple of 128

    if L % 128 == 0:
        tile_l = min(L, MAX_ALIGNED_TILE_L)        # lane-dense, unmasked vst
    elif 8 * L * 4 <= 4 * 1024 * 1024:
        tile_l = L                                 # full-extent lane block; Mosaic masks ragged edge
    else:
        tile_l = MAX_ALIGNED_TILE_L                # huge ragged L: boundary block masked by Pallas

    if R < 8:
        tile_r = R                                 # full-extent row block
    else:
        rows_fit = max(8, ((TARGET_TILE_BYTES // (tile_l * 4)) // 8) * 8)
        tile_r = min(rows_fit, _round_up(R, 8))    # multiple of 8 (sublane rule)

    grid_r = pl.cdiv(R, tile_r)
    grid_l = pl.cdiv(L, tile_l)

    # Pad only the tiny per-row param table so boundary row-blocks never read
    # undefined params (x boundary reads are garbage -> stores masked anyway).
    r_cover = grid_r * tile_r
    if r_cover != R:
        params = jnp.pad(params, ((0, r_cover - R), (0, 0)), constant_values=1.0)

    out2d = pl.pallas_call(
        _qdq_kernel,
        out_shape=jax.ShapeDtypeStruct((R, L), jnp.float32),
        grid=(grid_r, grid_l),
        in_specs=[
            pl.BlockSpec((tile_r, tile_l), lambda i, j: (i, j)),   # x tile
            pl.BlockSpec((tile_r, 4), lambda i, j: (i, 0)),        # packed per-row params
        ],
        out_specs=pl.BlockSpec((tile_r, tile_l), lambda i, j: (i, j)),
        compiler_params=pltpu.CompilerParams(
            dimension_semantics=("parallel", "parallel"),
            vmem_limit_bytes=32 * 1024 * 1024,     # explicit, safe on every generation
        ),
        cost_estimate=pl.CostEstimate(
            flops=5 * R * L,
            transcendentals=0,
            bytes_accessed=2 * R * L * 4 + R * 4 * 4,
        ),
    )(x2d, params)

    return out2d.reshape(N, C, H, W)               # contiguous reshape: free


if __name__ == "__main__":
    key = jax.random.PRNGKey(0)
    N, C, H, W = 2, 4, 16, 16

    # Deterministic inputs / per-channel quantization parameters (qint8, axis=1)
    x = jax.random.normal(key, (N, C, H, W), dtype=jnp.float32) * 3.0
    scales = jnp.array([0.05, 0.21, 0.62, 0.5], dtype=jnp.float32)
    zero_points = jnp.array([0, 4, -7, 1], dtype=jnp.int32)

    out = quantize_dequantize_per_channel(x, scales, zero_points, axis=1)
    jax.block_until_ready(out)

    # Pure-JAX reference with identical ATen ordering (round, add zp, clamp, dequantize).
    s = scales[None, :, None, None]
    z = zero_points.astype(jnp.float32)[None, :, None, None]
    q_ref = jnp.clip(z + jnp.round(x * (1.0 / s)), QMIN, QMAX)
    ref = (q_ref - z) * s

    assert out.shape == (N, C, H, W)
    assert jnp.allclose(out, ref, atol=1e-6), "mismatch vs reference"

    print("KERNEL_OK")
</pallas_src>

<mosaic_0001>
module attributes {stable_mosaic.version = 11 : i64} {
  func.func @_qdq_kernel(%arg0: i32, %arg1: i32, %arg2: memref<8x256xf32, #tpu.memory_space<vmem>>, %arg3: memref<8x4xf32, #tpu.memory_space<vmem>>, %arg4: memref<8x256xf32, #tpu.memory_space<vmem>>) attributes {dimension_semantics = [#tpu.dimension_semantics<parallel>, #tpu.dimension_semantics<parallel>], iteration_bounds = array<i64: 1, 1>, scalar_prefetch = 0 : i64, scratch_operands = 0 : i64, tpu.core_type = #tpu.core_type<tc>, window_params = [{transform_indices = @transform_0, window_bounds = array<i64: 8, 256>}, {transform_indices = @transform_1, window_bounds = array<i64: 8, 4>}, {transform_indices = @transform_2, window_bounds = array<i64: 8, 256>}]} {
    %c0 = arith.constant 0 : index
    %c0_0 = arith.constant 0 : index
    %0 = vector.load %arg2[%c0, %c0_0] : memref<8x256xf32, #tpu.memory_space<vmem>>, vector<8x256xf32>
    %c0_1 = arith.constant 0 : index
    %c0_2 = arith.constant 0 : index
    %1 = vector.load %arg3[%c0_1, %c0_2] : memref<8x4xf32, #tpu.memory_space<vmem>>, vector<8x4xf32>
    %2 = vector.extract_strided_slice %1 {offsets = [0, 0], sizes = [8, 1], strides = [1, 1]} : vector<8x4xf32> to vector<8x1xf32>
    %3 = vector.extract_strided_slice %1 {offsets = [0, 1], sizes = [8, 1], strides = [1, 1]} : vector<8x4xf32> to vector<8x1xf32>
    %4 = vector.extract_strided_slice %1 {offsets = [0, 2], sizes = [8, 1], strides = [1, 1]} : vector<8x4xf32> to vector<8x1xf32>
    %5 = vector.extract_strided_slice %1 {offsets = [0, 3], sizes = [8, 1], strides = [1, 1]} : vector<8x4xf32> to vector<8x1xf32>
    %6 = vector.broadcast %2 : vector<8x1xf32> to vector<8x256xf32>
    %7 = arith.mulf %0, %6 : vector<8x256xf32>
    %8 = math.roundeven %7 : vector<8x256xf32>
    %9 = vector.broadcast %4 : vector<8x1xf32> to vector<8x256xf32>
    %10 = arith.maximumf %9, %8 : vector<8x256xf32>
    %11 = vector.broadcast %5 : vector<8x1xf32> to vector<8x256xf32>
    %12 = arith.minimumf %11, %10 : vector<8x256xf32>
    %13 = vector.broadcast %3 : vector<8x1xf32> to vector<8x256xf32>
    %14 = arith.mulf %12, %13 : vector<8x256xf32>
    %c0_3 = arith.constant 0 : index
    %c0_4 = arith.constant 0 : index
    %15 = vector.load %arg4[%c0_3, %c0_4] : memref<8x256xf32, #tpu.memory_space<vmem>>, vector<8x256xf32>
    tpu.vector_store %arg4[%c0_3, %c0_4], %14 {strides = array<i32>} : memref<8x256xf32, #tpu.memory_space<vmem>>, vector<8x256xf32>,
    return
  }
  func.func @transform_0(%arg0: i32, %arg1: i32) -> (i32, i32) {
    %c0_i32 = arith.constant 0 : i32
    return %arg0, %arg1 : i32, i32
  }
  func.func @transform_1(%arg0: i32, %arg1: i32) -> (i32, i32) {
    %c0_i32 = arith.constant 0 : i32
    %c0_i32_0 = arith.constant 0 : i32
    return %arg0, %c0_i32 : i32, i32
  }
  func.func @transform_2(%arg0: i32, %arg1: i32) -> (i32, i32) {
    %c0_i32 = arith.constant 0 : i32
    return %arg0, %arg1 : i32, i32
  }
}

</mosaic_0001>

<llo_original>
// kernel: quantize_dequantize_per_channel.1
$region0: #{quantize_dequantize_per_channel.1}
  #allocation0 [shape = 'u32[]', space=smem, size = 0x4, offset = 0x4, fixed_abs, tag = 'smem constant byte address 0x4 - core index']
  #allocation1 [shape = 'u32[72,128]{1,0:T(1,128)}', space=vmem, size = 0x9000, scoped, tag = 'internal scratch']
  %s0 = inlined_call_operand.vmem [shape: f32[8,256], index: 0, kind: input, shape index: {}]
  %s1 = inlined_call_operand.vmem [shape: f32[8,4], index: 1, kind: input, shape index: {}]
  %s2 = inlined_call_operand.vmem [shape: f32[8,256], index: 2, kind: output, shape index: {}]
  %s3 = sld [smem:[#allocation0]]
  $region18: #{quantize_dequantize_per_channel.1} parent=0
    _
  %s5 = ssub.s32 1, %s3
  %s6 = scalar_select 0, %s5, %s3
  // Predicated region
  $region2: #{quantize_dequantize_per_channel.1} parent=0 // pred_check
    _
  $region3: #{quantize_dequantize_per_channel.1} parent=0 // pred_check_branch
    %8 = sbr.rel (0) target = $region5
  $region4: #{quantize_dequantize_per_channel.1} parent=0 // pred_region
    _
  $region5: #{quantize_dequantize_per_channel.1} parent=0 // pred_fallthru
    _
  // Predicated region
  $region6: #{quantize_dequantize_per_channel.1} parent=0 // pred_check
    _
  $region7: #{quantize_dequantize_per_channel.1} parent=0 // pred_check_branch
    %10 = sbr.rel (0) target = $region9
  $region8: #{quantize_dequantize_per_channel.1} parent=0 // pred_region
    _
  $region9: #{quantize_dequantize_per_channel.1} parent=0 // pred_fallthru
    _
  %v11 = vld [vmem:[%s0] sm:$0xff]
  %v12 = vld [vmem:[%s0 + $0x8] sm:$0xff]
  %v13 = vld [vmem:[%s1] sm:$0xff]
  %15 = vset.pattern.permute.xlu0 0
  %16 = vperm.xlu0 %15, %v13
  %v17 = vpop.permute.xlu0 %16
  %v19 = vmul.f32 %v11, %v17
  %v20 = vmul.f32 %v12, %v17
  %v21 = vround.ne.pseudo %v19
  %v22 = vround.ne.pseudo %v20
  %23 = vset.pattern.permute.xlu0 2
  %24 = vperm.xlu0 %23, %v13
  %v25 = vpop.permute.xlu0 %24
  %v27 = vmax.f32 %v25, %v21
  %v28 = vmax.f32 %v25, %v22
  %29 = vset.pattern.permute.xlu0 3
  %30 = vperm.xlu0 %29, %v13
  %v31 = vpop.permute.xlu0 %30
  %v33 = vmin.f32 %v31, %v27
  %v34 = vmin.f32 %v31, %v28
  %35 = vset.pattern.permute.xlu0 1
  %36 = vperm.xlu0 %35, %v13
  %v37 = vpop.permute.xlu0 %36
  %v39 = vmul.f32 %v33, %v37
  %v40 = vmul.f32 %v34, %v37
  %41 = vst [vmem:[%s2] sm:$0xff] %v39
  %42 = vst [vmem:[%s2 + $0x8] sm:$0xff] %v40
  // Predicated region
  $region10: #{quantize_dequantize_per_channel.1} parent=0 // pred_check
    _
  $region11: #{quantize_dequantize_per_channel.1} parent=0 // pred_check_branch
    %44 = sbr.rel (0) target = $region13
  $region12: #{quantize_dequantize_per_channel.1} parent=0 // pred_region
    _
  $region13: #{quantize_dequantize_per_channel.1} parent=0 // pred_fallthru
    _
  // Predicated region
  $region14: #{quantize_dequantize_per_channel.1} parent=0 // pred_check
    _
  $region15: #{quantize_dequantize_per_channel.1} parent=0 // pred_check_branch
    %46 = sbr.rel (0) target = $region17
  $region16: #{quantize_dequantize_per_channel.1} parent=0 // pred_region
    _
  $region17: #{quantize_dequantize_per_channel.1} parent=0 // pred_fallthru
    _

</llo_original>
